<compile_context>
chip_gen: v7x
topology: tpu7x:2x2x1
jax: 0.10.0
libtpu: 0.0.40
codegen_flags: <defaults>
</compile_context>

<pallas_src>
import math

import jax
import jax.numpy as jnp
from jax.experimental import pallas as pl
from jax.experimental.pallas import tpu as pltpu

LANE = 128      # vreg lane width (last dim)
SUBLANE = 8     # vreg sublane count for 32-bit dtypes (second-to-last dim)

_SINGLE_BUFFER_WEIGHTS_OK = None  # resolved on the first (eager) pallas_call


def _round_up(v, m):
    return ((v + m - 1) // m) * m


def mlp_kernel(x_ref, w1_ref, b1_ref, w2_ref, b2_ref, w3_ref, b3_ref,
               o_ref, h_ref):
    """Fused 3-layer MLP on one batch tile.

    MXU matmuls accumulate in f32; bias-add + ReLU run in f32 on the VPU; the
    hidden activation is staged through a single shared VMEM scratch in the
    compute dtype (bf16 under mixed precision), halving scratch store/load bytes.
    Only one intermediate is live at a time, so one scratch buffer suffices.
    """
    # hidden1 + ReLU
    h = jnp.dot(x_ref[...], w1_ref[...], preferred_element_type=jnp.float32)
    h_ref[...] = jnp.maximum(h + b1_ref[...], 0.0).astype(h_ref.dtype)

    # hidden2 + ReLU (reads the shared scratch, overwrites it)
    h = jnp.dot(h_ref[...], w2_ref[...], preferred_element_type=jnp.float32)
    h_ref[...] = jnp.maximum(h + b2_ref[...], 0.0).astype(h_ref.dtype)

    # output layer (no activation)
    out = jnp.dot(h_ref[...], w3_ref[...], preferred_element_type=jnp.float32)
    o_ref[...] = (out + b3_ref[...]).astype(o_ref.dtype)


def prepare_params(params, *, compute_dtype=jnp.bfloat16):
    """One-time parameter preparation (hoisted out of the per-call path).

    Zero-pads all feature dims to lane (128) multiples -- semantics-preserving
    through Linear+ReLU, padded output columns are sliced off later -- and casts
    weights to the MXU operand dtype.  Biases stay f32 (bias-add/ReLU are f32).

    compute_dtype=jnp.bfloat16 (default) gives MXU-peak operands with f32
    accumulation; pass jnp.float32 for exact PyTorch-equivalent numerics.
    """
    w1, b1 = jnp.asarray(params["w1"]), jnp.asarray(params["b1"])
    w2, b2 = jnp.asarray(params["w2"]), jnp.asarray(params["b2"])
    w3, b3 = jnp.asarray(params["w3"]), jnp.asarray(params["b3"])

    n_in, n_hid = w1.shape
    n_out = w3.shape[1]
    n_in_p, n_hid_p, n_out_p = (_round_up(d, LANE) for d in (n_in, n_hid, n_out))

    def pad2(a, rows, cols, dtype):
        return jnp.pad(a, ((0, rows - a.shape[0]), (0, cols - a.shape[1]))).astype(dtype)

    return {
        "w1": pad2(w1, n_in_p, n_hid_p, compute_dtype),
        "b1": pad2(b1, 1, n_hid_p, jnp.float32),
        "w2": pad2(w2, n_hid_p, n_hid_p, compute_dtype),
        "b2": pad2(b2, 1, n_hid_p, jnp.float32),
        "w3": pad2(w3, n_hid_p, n_out_p, compute_dtype),
        "b3": pad2(b3, 1, n_out_p, jnp.float32),
        "dims": (n_in, n_hid, n_out),
    }


def feedforward_net(x, prepared, *, batch_tile=512, core_parallel=False):
    """Forward pass. x: [B, n_input] f32; prepared: output of prepare_params."""
    global _SINGLE_BUFFER_WEIGHTS_OK

    w1, b1 = prepared["w1"], prepared["b1"]
    w2, b2 = prepared["w2"], prepared["b2"]
    w3, b3 = prepared["w3"], prepared["b3"]
    n_in, n_hid, n_out = prepared["dims"]

    cdt = w1.dtype                       # MXU operand / scratch dtype
    n_in_p, n_hid_p = w1.shape
    n_out_p = w3.shape[1]

    B = x.shape[0]
    assert x.shape[1] == n_in, f"expected {n_in} input features, got {x.shape[1]}"

    # Batch tile: round to the sublane packing multiple of the compute dtype
    # (8 rows/vreg f32, 16 bf16, 32 int8/fp8).  With the default batch_tile=512
    # small batches collapse to a single grid step (no per-step overhead on
    # single-TC v5e/v6e).
    sub_mult = max(SUBLANE, 32 // cdt.itemsize)
    tile_b = _round_up(min(batch_tile, _round_up(B, sub_mult)), sub_mult)
    if core_parallel and B > sub_mult:
        # v7x: ensure >= 2 grid steps so both TensorCores get work.
        tile_b = min(tile_b, _round_up((B + 1) // 2, sub_mult))
    B_p = _round_up(B, tile_b)
    grid_b = B_p // tile_b

    # Per-call work on activations only (weights were padded/cast once).
    x_p = jnp.pad(x, ((0, B_p - B), (0, n_in_p - n_in))).astype(cdt)

    # Scoped-VMEM budget: double-buffered x/out tiles + resident weights/biases
    # (budgeted double-buffered so one number covers the fallback path) + shared
    # scratch, +25% headroom; clamped to stay well under v7x's 64 MiB physical.
    weight_bytes = (w1.size + w2.size + w3.size) * cdt.itemsize
    bias_bytes = (b1.size + b2.size + b3.size) * 4
    io_bytes = 2 * tile_b * (n_in_p * cdt.itemsize + n_out_p * x.dtype.itemsize)
    scratch_bytes = tile_b * n_hid_p * cdt.itemsize
    vmem_bytes = int(1.25 * (2 * (weight_bytes + bias_bytes) + io_bytes + scratch_bytes))
    vmem_bytes = min(max(vmem_bytes, 8 * 1024 * 1024), 56 * 1024 * 1024)

    dim_sem = (pltpu.CORE_PARALLEL,) if core_parallel else ("parallel",)

    def run(single_buffer_weights):
        # Weights/biases have constant index_maps (never re-fetched across batch
        # tiles); single-buffering them additionally halves their VMEM footprint.
        w_kwargs = {"pipeline_mode": pl.Buffered(1)} if single_buffer_weights else {}
        const = lambda i: (0, 0)
        return pl.pallas_call(
            mlp_kernel,
            out_shape=jax.ShapeDtypeStruct((B_p, n_out_p), x.dtype),
            grid_spec=pltpu.PrefetchScalarGridSpec(
                num_scalar_prefetch=0,
                grid=(grid_b,),
                in_specs=[
                    # activations: tiled over the (padded) batch
                    pl.BlockSpec((tile_b, n_in_p), lambda i: (i, 0)),
                    # resident weights / biases
                    pl.BlockSpec((n_in_p, n_hid_p), const, **w_kwargs),
                    pl.BlockSpec((1, n_hid_p), const, **w_kwargs),
                    pl.BlockSpec((n_hid_p, n_hid_p), const, **w_kwargs),
                    pl.BlockSpec((1, n_hid_p), const, **w_kwargs),
                    pl.BlockSpec((n_hid_p, n_out_p), const, **w_kwargs),
                    pl.BlockSpec((1, n_out_p), const, **w_kwargs),
                ],
                out_specs=pl.BlockSpec((tile_b, n_out_p), lambda i: (i, 0)),
                scratch_shapes=[pltpu.VMEM((tile_b, n_hid_p), cdt)],  # shared h1/h2
            ),
            compiler_params=pltpu.CompilerParams(
                dimension_semantics=dim_sem,
                vmem_limit_bytes=vmem_bytes,
            ),
        )(x_p, w1, b1, w2, b2, w3, b3)

    if _SINGLE_BUFFER_WEIGHTS_OK is None:
        try:
            out_p = run(True)
            _SINGLE_BUFFER_WEIGHTS_OK = True
        except Exception:
            # pl.Buffered(1) (experimental) rejected by this JAX/Mosaic build:
            # fall back to the default double-buffered pipeline (correctness and
            # layout are identical; only resident-weight VMEM doubles).
            _SINGLE_BUFFER_WEIGHTS_OK = False
            out_p = run(False)
    else:
        out_p = run(_SINGLE_BUFFER_WEIGHTS_OK)

    # strip batch / output-channel padding
    return out_p[:B, :n_out]


def init_params(key, n_input, n_hidden, n_output):
    """Deterministic init mimicking nn.Linear's default (uniform +/- 1/sqrt(fan_in))."""
    keys = jax.random.split(key, 6)

    def linear(kw, kb, fan_in, fan_out):
        bound = 1.0 / math.sqrt(fan_in)
        w = jax.random.uniform(kw, (fan_in, fan_out), jnp.float32, -bound, bound)
        b = jax.random.uniform(kb, (1, fan_out), jnp.float32, -bound, bound)
        return w, b

    w1, b1 = linear(keys[0], keys[1], n_input, n_hidden)
    w2, b2 = linear(keys[2], keys[3], n_hidden, n_hidden)
    w3, b3 = linear(keys[4], keys[5], n_hidden, n_output)
    return {"w1": w1, "b1": b1, "w2": w2, "b2": b2, "w3": w3, "b3": b3}


def reference_forward(x, p):
    h = jnp.maximum(x @ p["w1"] + p["b1"], 0.0)
    h = jnp.maximum(h @ p["w2"] + p["b2"], 0.0)
    return h @ p["w3"] + p["b3"]


if __name__ == "__main__":
    n_input, n_hidden, n_output = 16, 32, 8
    batch = 16

    key = jax.random.PRNGKey(0)
    k_x, k_p, k_x2 = jax.random.split(key, 3)
    x = jax.random.normal(k_x, (batch, n_input), jnp.float32)
    params = init_params(k_p, n_input, n_hidden, n_output)

    # --- f32 compute path: exact PyTorch-equivalent numerics, single lane-dense tile ---
    prep_f32 = prepare_params(params, compute_dtype=jnp.float32)
    out = jax.block_until_ready(feedforward_net(x, prep_f32))
    ref = reference_forward(x, params)
    assert out.shape == (batch, n_output)
    assert jnp.allclose(out, ref, atol=1e-5, rtol=1e-5), "f32 mismatch vs reference"

    # --- default bf16 MXU-operand path (f32 accumulation + f32 bias), non-divisible
    #     batch exercising cdiv-style padding + a multi-step batch grid ---
    batch2 = 48  # with batch_tile=32 and bf16 (16-row packing): pads to 64 -> 2 grid steps
    x2 = jax.random.normal(k_x2, (batch2, n_input), jnp.float32)
    prep_bf16 = prepare_params(params)  # bf16 operands by default (v6e/v7x MXU peak)
    out2 = jax.block_until_ready(feedforward_net(x2, prep_bf16, batch_tile=32))
    ref2 = reference_forward(x2, params)
    assert out2.shape == (batch2, n_output)
    assert jnp.allclose(out2, ref2, atol=1.5e-1, rtol=1e-1), "bf16 mismatch vs reference"

    print("KERNEL_OK")
</pallas_src>

<mosaic_0001>
module attributes {stable_mosaic.version = 11 : i64} {
  func.func @mlp_kernel(%arg0: i32, %arg1: memref<16x128xf32, #tpu.memory_space<vmem>>, %arg2: memref<128x128xf32, #tpu.memory_space<vmem>>, %arg3: memref<1x128xf32, #tpu.memory_space<vmem>>, %arg4: memref<128x128xf32, #tpu.memory_space<vmem>>, %arg5: memref<1x128xf32, #tpu.memory_space<vmem>>, %arg6: memref<128x128xf32, #tpu.memory_space<vmem>>, %arg7: memref<1x128xf32, #tpu.memory_space<vmem>>, %arg8: memref<16x128xf32, #tpu.memory_space<vmem>>, %arg9: memref<16x128xf32, #tpu.memory_space<vmem>>) attributes {dimension_semantics = [#tpu.dimension_semantics<parallel>], iteration_bounds = array<i64: 1>, scalar_prefetch = 0 : i64, scratch_operands = 1 : i64, tpu.core_type = #tpu.core_type<tc>, window_params = [{transform_indices = @transform_0, window_bounds = array<i64: 16, 128>}, {pipeline_mode = #tpu.pipeline_mode<synchronous>, transform_indices = @transform_1, window_bounds = array<i64: 128, 128>}, {pipeline_mode = #tpu.pipeline_mode<synchronous>, transform_indices = @transform_2, window_bounds = array<i64: 1, 128>}, {pipeline_mode = #tpu.pipeline_mode<synchronous>, transform_indices = @transform_3, window_bounds = array<i64: 128, 128>}, {pipeline_mode = #tpu.pipeline_mode<synchronous>, transform_indices = @transform_4, window_bounds = array<i64: 1, 128>}, {pipeline_mode = #tpu.pipeline_mode<synchronous>, transform_indices = @transform_5, window_bounds = array<i64: 128, 128>}, {pipeline_mode = #tpu.pipeline_mode<synchronous>, transform_indices = @transform_6, window_bounds = array<i64: 1, 128>}, {transform_indices = @transform_7, window_bounds = array<i64: 16, 128>}]} {
    %c0 = arith.constant 0 : index
    %c0_0 = arith.constant 0 : index
    %0 = vector.load %arg1[%c0, %c0_0] : memref<16x128xf32, #tpu.memory_space<vmem>>, vector<16x128xf32>
    %c0_1 = arith.constant 0 : index
    %c0_2 = arith.constant 0 : index
    %1 = vector.load %arg2[%c0_1, %c0_2] : memref<128x128xf32, #tpu.memory_space<vmem>>, vector<128x128xf32>
    %cst = arith.constant dense<0.000000e+00> : vector<16x128xf32>
    %2 = tpu.matmul %0, %1, %cst {dimension_numbers = #tpu.dot_dimension_numbers<[1], [0], [0], [1], [0, 0, 1, 1], [], []>} : vector<16x128xf32>, vector<128x128xf32>, vector<16x128xf32> -> vector<16x128xf32>
    %c0_3 = arith.constant 0 : index
    %c0_4 = arith.constant 0 : index
    %3 = vector.load %arg3[%c0_3, %c0_4] : memref<1x128xf32, #tpu.memory_space<vmem>>, vector<1x128xf32>
    %4 = vector.broadcast %3 : vector<1x128xf32> to vector<16x128xf32>
    %5 = arith.addf %2, %4 : vector<16x128xf32>
    %cst_5 = arith.constant 0.000000e+00 : f32
    %6 = vector.broadcast %cst_5 : f32 to vector<16x128xf32>
    %7 = arith.maximumf %5, %6 : vector<16x128xf32>
    %c0_6 = arith.constant 0 : index
    %c0_7 = arith.constant 0 : index
    %8 = vector.load %arg9[%c0_6, %c0_7] : memref<16x128xf32, #tpu.memory_space<vmem>>, vector<16x128xf32>
    tpu.vector_store %arg9[%c0_6, %c0_7], %7 {strides = array<i32>} : memref<16x128xf32, #tpu.memory_space<vmem>>, vector<16x128xf32>,
    %c0_8 = arith.constant 0 : index
    %c0_9 = arith.constant 0 : index
    %9 = vector.load %arg9[%c0_8, %c0_9] : memref<16x128xf32, #tpu.memory_space<vmem>>, vector<16x128xf32>
    %c0_10 = arith.constant 0 : index
    %c0_11 = arith.constant 0 : index
    %10 = vector.load %arg4[%c0_10, %c0_11] : memref<128x128xf32, #tpu.memory_space<vmem>>, vector<128x128xf32>
    %cst_12 = arith.constant dense<0.000000e+00> : vector<16x128xf32>
    %11 = tpu.matmul %9, %10, %cst_12 {dimension_numbers = #tpu.dot_dimension_numbers<[1], [0], [0], [1], [0, 0, 1, 1], [], []>} : vector<16x128xf32>, vector<128x128xf32>, vector<16x128xf32> -> vector<16x128xf32>
    %c0_13 = arith.constant 0 : index
    %c0_14 = arith.constant 0 : index
    %12 = vector.load %arg5[%c0_13, %c0_14] : memref<1x128xf32, #tpu.memory_space<vmem>>, vector<1x128xf32>
    %13 = vector.broadcast %12 : vector<1x128xf32> to vector<16x128xf32>
    %14 = arith.addf %11, %13 : vector<16x128xf32>
    %cst_15 = arith.constant 0.000000e+00 : f32
    %15 = vector.broadcast %cst_15 : f32 to vector<16x128xf32>
    %16 = arith.maximumf %14, %15 : vector<16x128xf32>
    %c0_16 = arith.constant 0 : index
    %c0_17 = arith.constant 0 : index
    %17 = vector.load %arg9[%c0_16, %c0_17] : memref<16x128xf32, #tpu.memory_space<vmem>>, vector<16x128xf32>
    tpu.vector_store %arg9[%c0_16, %c0_17], %16 {strides = array<i32>} : memref<16x128xf32, #tpu.memory_space<vmem>>, vector<16x128xf32>,
    %c0_18 = arith.constant 0 : index
    %c0_19 = arith.constant 0 : index
    %18 = vector.load %arg9[%c0_18, %c0_19] : memref<16x128xf32, #tpu.memory_space<vmem>>, vector<16x128xf32>
    %c0_20 = arith.constant 0 : index
    %c0_21 = arith.constant 0 : index
    %19 = vector.load %arg6[%c0_20, %c0_21] : memref<128x128xf32, #tpu.memory_space<vmem>>, vector<128x128xf32>
    %cst_22 = arith.constant dense<0.000000e+00> : vector<16x128xf32>
    %20 = tpu.matmul %18, %19, %cst_22 {dimension_numbers = #tpu.dot_dimension_numbers<[1], [0], [0], [1], [0, 0, 1, 1], [], []>} : vector<16x128xf32>, vector<128x128xf32>, vector<16x128xf32> -> vector<16x128xf32>
    %c0_23 = arith.constant 0 : index
    %c0_24 = arith.constant 0 : index
    %21 = vector.load %arg7[%c0_23, %c0_24] : memref<1x128xf32, #tpu.memory_space<vmem>>, vector<1x128xf32>
    %22 = vector.broadcast %21 : vector<1x128xf32> to vector<16x128xf32>
    %23 = arith.addf %20, %22 : vector<16x128xf32>
    %c0_25 = arith.constant 0 : index
    %c0_26 = arith.constant 0 : index
    %24 = vector.load %arg8[%c0_25, %c0_26] : memref<16x128xf32, #tpu.memory_space<vmem>>, vector<16x128xf32>
    tpu.vector_store %arg8[%c0_25, %c0_26], %23 {strides = array<i32>} : memref<16x128xf32, #tpu.memory_space<vmem>>, vector<16x128xf32>,
    return
  }
  func.func @transform_0(%arg0: i32) -> (i32, i32) {
    %c0_i32 = arith.constant 0 : i32
    %c0_i32_0 = arith.constant 0 : i32
    return %arg0, %c0_i32 : i32, i32
  }
  func.func @transform_1(%arg0: i32) -> (i32, i32) {
    %c0_i32 = arith.constant 0 : i32
    %c0_i32_0 = arith.constant 0 : i32
    %c0_i32_1 = arith.constant 0 : i32
    return %c0_i32, %c0_i32_0 : i32, i32
  }
  func.func @transform_2(%arg0: i32) -> (i32, i32) {
    %c0_i32 = arith.constant 0 : i32
    %c0_i32_0 = arith.constant 0 : i32
    %c0_i32_1 = arith.constant 0 : i32
    return %c0_i32, %c0_i32_0 : i32, i32
  }
  func.func @transform_3(%arg0: i32) -> (i32, i32) {
    %c0_i32 = arith.constant 0 : i32
    %c0_i32_0 = arith.constant 0 : i32
    %c0_i32_1 = arith.constant 0 : i32
    return %c0_i32, %c0_i32_0 : i32, i32
  }
  func.func @transform_4(%arg0: i32) -> (i32, i32) {
    %c0_i32 = arith.constant 0 : i32
    %c0_i32_0 = arith.constant 0 : i32
    %c0_i32_1 = arith.constant 0 : i32
    return %c0_i32, %c0_i32_0 : i32, i32
  }
  func.func @transform_5(%arg0: i32) -> (i32, i32) {
    %c0_i32 = arith.constant 0 : i32
    %c0_i32_0 = arith.constant 0 : i32
    %c0_i32_1 = arith.constant 0 : i32
    return %c0_i32, %c0_i32_0 : i32, i32
  }
  func.func @transform_6(%arg0: i32) -> (i32, i32) {
    %c0_i32 = arith.constant 0 : i32
    %c0_i32_0 = arith.constant 0 : i32
    %c0_i32_1 = arith.constant 0 : i32
    return %c0_i32, %c0_i32_0 : i32, i32
  }
  func.func @transform_7(%arg0: i32) -> (i32, i32) {
    %c0_i32 = arith.constant 0 : i32
    %c0_i32_0 = arith.constant 0 : i32
    return %arg0, %c0_i32 : i32, i32
  }
}

module attributes {stable_mosaic.version = 11 : i64} {
  func.func @mlp_kernel(%arg0: i32, %arg1: memref<16x128xf32, #tpu.memory_space<vmem>>, %arg2: memref<128x128xf32, #tpu.memory_space<vmem>>, %arg3: memref<1x128xf32, #tpu.memory_space<vmem>>, %arg4: memref<128x128xf32, #tpu.memory_space<vmem>>, %arg5: memref<1x128xf32, #tpu.memory_space<vmem>>, %arg6: memref<128x128xf32, #tpu.memory_space<vmem>>, %arg7: memref<1x128xf32, #tpu.memory_space<vmem>>, %arg8: memref<16x128xf32, #tpu.memory_space<vmem>>, %arg9: memref<16x128xf32, #tpu.memory_space<vmem>>) attributes {dimension_semantics = [#tpu.dimension_semantics<parallel>], iteration_bounds = array<i64: 1>, scalar_prefetch = 0 : i64, scratch_operands = 1 : i64, tpu.core_type = #tpu.core_type<tc>, window_params = [{transform_indices = @transform_0, window_bounds = array<i64: 16, 128>}, {pipeline_mode = #tpu.pipeline_mode<synchronous>, transform_indices = @transform_1, window_bounds = array<i64: 128, 128>}, {pipeline_mode = #tpu.pipeline_mode<synchronous>, transform_indices = @transform_2, window_bounds = array<i64: 1, 128>}, {pipeline_mode = #tpu.pipeline_mode<synchronous>, transform_indices = @transform_3, window_bounds = array<i64: 128, 128>}, {pipeline_mode = #tpu.pipeline_mode<synchronous>, transform_indices = @transform_4, window_bounds = array<i64: 1, 128>}, {pipeline_mode = #tpu.pipeline_mode<synchronous>, transform_indices = @transform_5, window_bounds = array<i64: 128, 128>}, {pipeline_mode = #tpu.pipeline_mode<synchronous>, transform_indices = @transform_6, window_bounds = array<i64: 1, 128>}, {transform_indices = @transform_7, window_bounds = array<i64: 16, 128>}]} {
    %c0 = arith.constant 0 : index
    %c0_0 = arith.constant 0 : index
    %0 = vector.load %arg1[%c0, %c0_0] : memref<16x128xf32, #tpu.memory_space<vmem>>, vector<16x128xf32>
    %c0_1 = arith.constant 0 : index
    %c0_2 = arith.constant 0 : index
    %1 = vector.load %arg2[%c0_1, %c0_2] : memref<128x128xf32, #tpu.memory_space<vmem>>, vector<128x128xf32>
    %cst = arith.constant dense<0.000000e+00> : vector<16x128xf32>
    %2 = tpu.matmul %0, %1, %cst {dimension_numbers = #tpu.dot_dimension_numbers<[1], [0], [0], [1], [0, 0, 1, 1], [], []>} : vector<16x128xf32>, vector<128x128xf32>, vector<16x128xf32> -> vector<16x128xf32>
    %c0_3 = arith.constant 0 : index
    %c0_4 = arith.constant 0 : index
    %3 = vector.load %arg3[%c0_3, %c0_4] : memref<1x128xf32, #tpu.memory_space<vmem>>, vector<1x128xf32>
    %4 = vector.broadcast %3 : vector<1x128xf32> to vector<16x128xf32>
    %5 = arith.addf %2, %4 : vector<16x128xf32>
    %cst_5 = arith.constant 0.000000e+00 : f32
    %6 = vector.broadcast %cst_5 : f32 to vector<16x128xf32>
    %7 = arith.maximumf %5, %6 : vector<16x128xf32>
    %c0_6 = arith.constant 0 : index
    %c0_7 = arith.constant 0 : index
    %8 = vector.load %arg9[%c0_6, %c0_7] : memref<16x128xf32, #tpu.memory_space<vmem>>, vector<16x128xf32>
    tpu.vector_store %arg9[%c0_6, %c0_7], %7 {strides = array<i32>} : memref<16x128xf32, #tpu.memory_space<vmem>>, vector<16x128xf32>,
    %c0_8 = arith.constant 0 : index
    %c0_9 = arith.constant 0 : index
    %9 = vector.load %arg9[%c0_8, %c0_9] : memref<16x128xf32, #tpu.memory_space<vmem>>, vector<16x128xf32>
    %c0_10 = arith.constant 0 : index
    %c0_11 = arith.constant 0 : index
    %10 = vector.load %arg4[%c0_10, %c0_11] : memref<128x128xf32, #tpu.memory_space<vmem>>, vector<128x128xf32>
    %cst_12 = arith.constant dense<0.000000e+00> : vector<16x128xf32>
    %11 = tpu.matmul %9, %10, %cst_12 {dimension_numbers = #tpu.dot_dimension_numbers<[1], [0], [0], [1], [0, 0, 1, 1], [], []>} : vector<16x128xf32>, vector<128x128xf32>, vector<16x128xf32> -> vector<16x128xf32>
    %c0_13 = arith.constant 0 : index
    %c0_14 = arith.constant 0 : index
    %12 = vector.load %arg5[%c0_13, %c0_14] : memref<1x128xf32, #tpu.memory_space<vmem>>, vector<1x128xf32>
    %13 = vector.broadcast %12 : vector<1x128xf32> to vector<16x128xf32>
    %14 = arith.addf %11, %13 : vector<16x128xf32>
    %cst_15 = arith.constant 0.000000e+00 : f32
    %15 = vector.broadcast %cst_15 : f32 to vector<16x128xf32>
    %16 = arith.maximumf %14, %15 : vector<16x128xf32>
    %c0_16 = arith.constant 0 : index
    %c0_17 = arith.constant 0 : index
    %17 = vector.load %arg9[%c0_16, %c0_17] : memref<16x128xf32, #tpu.memory_space<vmem>>, vector<16x128xf32>
    tpu.vector_store %arg9[%c0_16, %c0_17], %16 {strides = array<i32>} : memref<16x128xf32, #tpu.memory_space<vmem>>, vector<16x128xf32>,
    %c0_18 = arith.constant 0 : index
    %c0_19 = arith.constant 0 : index
    %18 = vector.load %arg9[%c0_18, %c0_19] : memref<16x128xf32, #tpu.memory_space<vmem>>, vector<16x128xf32>
    %c0_20 = arith.constant 0 : index
    %c0_21 = arith.constant 0 : index
    %19 = vector.load %arg6[%c0_20, %c0_21] : memref<128x128xf32, #tpu.memory_space<vmem>>, vector<128x128xf32>
    %cst_22 = arith.constant dense<0.000000e+00> : vector<16x128xf32>
    %20 = tpu.matmul %18, %19, %cst_22 {dimension_numbers = #tpu.dot_dimension_numbers<[1], [0], [0], [1], [0, 0, 1, 1], [], []>} : vector<16x128xf32>, vector<128x128xf32>, vector<16x128xf32> -> vector<16x128xf32>
    %c0_23 = arith.constant 0 : index
    %c0_24 = arith.constant 0 : index
    %21 = vector.load %arg7[%c0_23, %c0_24] : memref<1x128xf32, #tpu.memory_space<vmem>>, vector<1x128xf32>
    %22 = vector.broadcast %21 : vector<1x128xf32> to vector<16x128xf32>
    %23 = arith.addf %20, %22 : vector<16x128xf32>
    %c0_25 = arith.constant 0 : index
    %c0_26 = arith.constant 0 : index
    %24 = vector.load %arg8[%c0_25, %c0_26] : memref<16x128xf32, #tpu.memory_space<vmem>>, vector<16x128xf32>
    tpu.vector_store %arg8[%c0_25, %c0_26], %23 {strides = array<i32>} : memref<16x128xf32, #tpu.memory_space<vmem>>, vector<16x128xf32>,
    return
  }
  func.func @transform_0(%arg0: i32) -> (i32, i32) {
    %c0_i32 = arith.constant 0 : i32
    %c0_i32_0 = arith.constant 0 : i32
    return %arg0, %c0_i32 : i32, i32
  }
  func.func @transform_1(%arg0: i32) -> (i32, i32) {
    %c0_i32 = arith.constant 0 : i32
    %c0_i32_0 = arith.constant 0 : i32
    %c0_i32_1 = arith.constant 0 : i32
    return %c0_i32, %c0_i32_0 : i32, i32
  }
  func.func @transform_2(%arg0: i32) -> (i32, i32) {
    %c0_i32 = arith.constant 0 : i32
    %c0_i32_0 = arith.constant 0 : i32
    %c0_i32_1 = arith.constant 0 : i32
    return %c0_i32, %c0_i32_0 : i32, i32
  }
  func.func @transform_3(%arg0: i32) -> (i32, i32) {
    %c0_i32 = arith.constant 0 : i32
    %c0_i32_0 = arith.constant 0 : i32
    %c0_i32_1 = arith.constant 0 : i32
    return %c0_i32, %c0_i32_0 : i32, i32
  }
  func.func @transform_4(%arg0: i32) -> (i32, i32) {
    %c0_i32 = arith.constant 0 : i32
    %c0_i32_0 = arith.constant 0 : i32
    %c0_i32_1 = arith.constant 0 : i32
    return %c0_i32, %c0_i32_0 : i32, i32
  }
  func.func @transform_5(%arg0: i32) -> (i32, i32) {
    %c0_i32 = arith.constant 0 : i32
    %c0_i32_0 = arith.constant 0 : i32
    %c0_i32_1 = arith.constant 0 : i32
    return %c0_i32, %c0_i32_0 : i32, i32
  }
  func.func @transform_6(%arg0: i32) -> (i32, i32) {
    %c0_i32 = arith.constant 0 : i32
    %c0_i32_0 = arith.constant 0 : i32
    %c0_i32_1 = arith.constant 0 : i32
    return %c0_i32, %c0_i32_0 : i32, i32
  }
  func.func @transform_7(%arg0: i32) -> (i32, i32) {
    %c0_i32 = arith.constant 0 : i32
    %c0_i32_0 = arith.constant 0 : i32
    return %arg0, %c0_i32 : i32, i32
  }
}

</mosaic_0001>

<llo_original>
// kernel: tpu_custom_call.1
$region0: #{tpu_custom_call.1}
  #allocation0 [shape = 'u32[]', space=smem, size = 0x4, offset = 0x4, fixed_abs, tag = 'smem constant byte address 0x4 - core index']
  #allocation1 [shape = 'u32[144,128]{1,0:T(1,128)}', space=vmem, size = 0x12000, scoped, tag = 'internal scratch']
  #allocation2 [shape = 'f32[16,128]{1,0:T(8,128)}', space=vmem, size = 0x2000, scoped, tag = 'scratch operand']
  %s0 = inlined_call_operand.hbm [shape: f32[16,128], index: 0, kind: input, shape index: {}]
  %s1 = inlined_call_operand.hbm [shape: f32[128,128], index: 1, kind: input, shape index: {}]
  %s2 = inlined_call_operand.vmem [shape: f32[1,128], index: 2, kind: input, shape index: {}]
  %s3 = inlined_call_operand.hbm [shape: f32[128,128], index: 3, kind: input, shape index: {}]
  %s4 = inlined_call_operand.vmem [shape: f32[1,128], index: 4, kind: input, shape index: {}]
  %s5 = inlined_call_operand.hbm [shape: f32[128,128], index: 5, kind: input, shape index: {}]
  %s6 = inlined_call_operand.vmem [shape: f32[1,128], index: 6, kind: input, shape index: {}]
  %s7 = inlined_call_operand.hbm [shape: f32[16,128], index: 7, kind: output, shape index: {}]
  %s8 = sld [smem:[#allocation0]]
  $region54: #{tpu_custom_call.1} parent=0
    _
  %s10 = ssub.s32 1, %s8
  %s11 = scalar_select 0, %s10, %s8
  $region1: #{tpu_custom_call.1} parent=0
    #allocation3 [shape = 'u8[8192]{0}', space=vmem, size = 0x2000, scoped, tag = 'input window, operand 0, single buffered']
    #allocation4 [shape = 's32[1]{0}', space=sflag, size = 0x4, scoped, tag = 'scoped memory for tpu_custom_call.1']
    #allocation5 [shape = 's32[1]{0}', space=sflag, size = 0x4, scoped, tag = 'scoped memory for tpu_custom_call.1']
    #allocation6 [shape = 'u8[65536]{0}', space=vmem, size = 0x10000, scoped, tag = 'input window, operand 1, single buffered']
    #allocation7 [shape = 's32[1]{0}', space=sflag, size = 0x4, scoped, tag = 'scoped memory for tpu_custom_call.1']
    #allocation8 [shape = 'u8[65536]{0}', space=vmem, size = 0x10000, scoped, tag = 'input window, operand 3, single buffered']
    #allocation9 [shape = 'u8[65536]{0}', space=vmem, size = 0x10000, scoped, tag = 'input window, operand 5, single buffered']
    #allocation10 [shape = 's32[1]{0}', space=sflag, size = 0x4, scoped, tag = 'scoped memory for tpu_custom_call.1']
    #allocation11 [shape = 'u8[8192]{0}', space=vmem, size = 0x2000, scoped, tag = 'output window, operand 0, single buffered']
    %12 = vsyncpa [#allocation4], 0
    %13 = vsyncpa [#allocation7], 0
    %14 = vsyncpa [#allocation10], 0
    %15 = vsyncpa [#allocation5], 0
    // Predicated region
    $region2: #{tpu_custom_call.1} parent=1 // pred_check
      _
    $region3: #{tpu_custom_call.1} parent=1 // pred_check_branch
      %17 = sbr.rel (0) target = $region5
    $region4: #{tpu_custom_call.1} parent=1 // pred_region
      %s19 = ssub.s32 256, 256
      %20 = vsyncadd [#allocation4], %s19
      %s21 = sshll.u32 [#allocation3], 4
      %s22 = int_to_ptr.vmem [resolvable:$true] %s21
      %27 = dma.hbm_to_vmem [thread:$0]  %s0, 256, %s22, [#allocation4], 128, 128, 8
    $region5: #{tpu_custom_call.1} parent=1 // pred_fallthru
      _
    // Predicated region
    $region6: #{tpu_custom_call.1} parent=1 // pred_check
      _
    $region7: #{tpu_custom_call.1} parent=1 // pred_check_branch
      %29 = sbr.rel (0) target = $region9
    $region8: #{tpu_custom_call.1} parent=1 // pred_region
      %s31 = ssub.s32 2048, 2048
      %32 = vsyncadd [#allocation7], %s31
      %s33 = sshll.u32 [#allocation6], 4
      %s34 = int_to_ptr.vmem [resolvable:$true] %s33
      %39 = dma.hbm_to_vmem [thread:$0]  %s1, 2048, %s34, [#allocation7], 128, 128, 8
    $region9: #{tpu_custom_call.1} parent=1 // pred_fallthru
      _
    // Predicated region
    $region10: #{tpu_custom_call.1} parent=1 // pred_check
      _
    $region11: #{tpu_custom_call.1} parent=1 // pred_check_branch
      %41 = sbr.rel (0) target = $region13
    $region12: #{tpu_custom_call.1} parent=1 // pred_region
      _
    $region13: #{tpu_custom_call.1} parent=1 // pred_fallthru
      _
    // Predicated region
    $region14: #{tpu_custom_call.1} parent=1 // pred_check
      _
    $region15: #{tpu_custom_call.1} parent=1 // pred_check_branch
      %43 = sbr.rel (0) target = $region17
    $region16: #{tpu_custom_call.1} parent=1 // pred_region
      %s45 = ssub.s32 2048, 2048
      %46 = vsyncadd [#allocation7], %s45
      %s47 = sshll.u32 [#allocation8], 4
      %s48 = int_to_ptr.vmem [resolvable:$true] %s47
      %53 = dma.hbm_to_vmem [thread:$0]  %s3, 2048, %s48, [#allocation7], 128, 128, 8
    $region17: #{tpu_custom_call.1} parent=1 // pred_fallthru
      _
    // Predicated region
    $region18: #{tpu_custom_call.1} parent=1 // pred_check
      _
    $region19: #{tpu_custom_call.1} parent=1 // pred_check_branch
      %55 = sbr.rel (0) target = $region21
    $region20: #{tpu_custom_call.1} parent=1 // pred_region
      _
    $region21: #{tpu_custom_call.1} parent=1 // pred_fallthru
      _
    // Predicated region
    $region22: #{tpu_custom_call.1} parent=1 // pred_check
      _
    $region23: #{tpu_custom_call.1} parent=1 // pred_check_branch
      %57 = sbr.rel (0) target = $region25
    $region24: #{tpu_custom_call.1} parent=1 // pred_region
      %s59 = ssub.s32 2048, 2048
      %60 = vsyncadd [#allocation10], %s59
      %s61 = sshll.u32 [#allocation9], 4
      %s62 = int_to_ptr.vmem [resolvable:$true] %s61
      %67 = dma.hbm_to_vmem [thread:$0]  %s5, 2048, %s62, [#allocation10], 128, 128, 8
    $region25: #{tpu_custom_call.1} parent=1 // pred_fallthru
      _
    // Predicated region
    $region26: #{tpu_custom_call.1} parent=1 // pred_check
      _
    $region27: #{tpu_custom_call.1} parent=1 // pred_check_branch
      %69 = sbr.rel (0) target = $region29
    $region28: #{tpu_custom_call.1} parent=1 // pred_region
      _
    $region29: #{tpu_custom_call.1} parent=1 // pred_fallthru
      _
    // Predicated region
    $region30: #{tpu_custom_call.1} parent=1 // pred_check
      _
    $region31: #{tpu_custom_call.1} parent=1 // pred_check_branch
      %71 = sbr.rel (0) target = $region33
    $region32: #{tpu_custom_call.1} parent=1 // pred_region
      %72 = dma.done [#allocation4], 256
    $region33: #{tpu_custom_call.1} parent=1 // pred_fallthru
      _
    // Predicated region
    $region34: #{tpu_custom_call.1} parent=1 // pred_check
      _
    $region35: #{tpu_custom_call.1} parent=1 // pred_check_branch
      %74 = sbr.rel (0) target = $region37
    $region36: #{tpu_custom_call.1} parent=1 // pred_region
      %75 = dma.done [#allocation7], 2048
    $region37: #{tpu_custom_call.1} parent=1 // pred_fallthru
      _
    // Predicated region
    $region38: #{tpu_custom_call.1} parent=1 // pred_check
      _
    $region39: #{tpu_custom_call.1} parent=1 // pred_check_branch
      %77 = sbr.rel (0) target = $region41
    $region40: #{tpu_custom_call.1} parent=1 // pred_region
      %78 = dma.done [#allocation7], 2048
    $region41: #{tpu_custom_call.1} parent=1 // pred_fallthru
      _
    // Predicated region
    $region42: #{tpu_custom_call.1} parent=1 // pred_check
      _
    $region43: #{tpu_custom_call.1} parent=1 // pred_check_branch
      %80 = sbr.rel (0) target = $region45
    $region44: #{tpu_custom_call.1} parent=1 // pred_region
      %81 = dma.done [#allocation10], 2048
    $region45: #{tpu_custom_call.1} parent=1 // pred_fallthru
      _
    %v82 = vld [vmem:[#allocation3] sm:$0xff]
    %v83 = vld [vmem:[#allocation3 + $0x8] sm:$0xff]
    %v84 = vld [vmem:[#allocation6] sm:$0xff]
    %v85 = vld [vmem:[#allocation6 + $0x8] sm:$0xff]
    %v86 = vld [vmem:[#allocation6 + $0x10] sm:$0xff]
    %v87 = vld [vmem:[#allocation6 + $0x18] sm:$0xff]
    %v88 = vld [vmem:[#allocation6 + $0x20] sm:$0xff]
    %v89 = vld [vmem:[#allocation6 + $0x28] sm:$0xff]
    %v90 = vld [vmem:[#allocation6 + $0x30] sm:$0xff]
    %v91 = vld [vmem:[#allocation6 + $0x38] sm:$0xff]
    %v92 = vld [vmem:[#allocation6 + $0x40] sm:$0xff]
    %v93 = vld [vmem:[#allocation6 + $0x48] sm:$0xff]
    %v94 = vld [vmem:[#allocation6 + $0x50] sm:$0xff]
    %v95 = vld [vmem:[#allocation6 + $0x58] sm:$0xff]
    %v96 = vld [vmem:[#allocation6 + $0x60] sm:$0xff]
    %v97 = vld [vmem:[#allocation6 + $0x68] sm:$0xff]
    %v98 = vld [vmem:[#allocation6 + $0x70] sm:$0xff]
    %v99 = vld [vmem:[#allocation6 + $0x78] sm:$0xff]
    %v100 = vld [vmem:[%s2] sm:$0x1]
    %v102 = vlaneseq
    %v103 = vshrl.u32 %v102, 7
    %v104 = vsub.s32 0, %v103
    %v105 = vrot.slane %v100, %v104
    %107 = vmatprep.subr.mxu0 0.0
    %108 = vmatpush1.msra.mxu0 %v84
    %109 = vmatprep.subr.mxu0 0.0
    %110 = vmatpush1.msra.mxu0 %v85
    %111 = vmatprep.subr.mxu0 0.0
    %112 = vmatpush1.msra.mxu0 %v86
    %113 = vmatprep.subr.mxu0 0.0
    %114 = vmatpush1.msra.mxu0 %v87
    %115 = vmatprep.subr.mxu0 0.0
    %116 = vmatpush1.msra.mxu0 %v88
    %117 = vmatprep.subr.mxu0 0.0
    %118 = vmatpush1.msra.mxu0 %v89
    %119 = vmatprep.subr.mxu0 0.0
    %120 = vmatpush1.msra.mxu0 %v90
    %121 = vmatprep.subr.mxu0 0.0
    %122 = vmatpush1.msra.mxu0 %v91
    %123 = vmatprep.subr.mxu0 0.0
    %124 = vmatpush1.msra.mxu0 %v92
    %125 = vmatprep.subr.mxu0 0.0
    %126 = vmatpush1.msra.mxu0 %v93
    %127 = vmatprep.subr.mxu0 0.0
    %128 = vmatpush1.msra.mxu0 %v94
    %129 = vmatprep.subr.mxu0 0.0
    %130 = vmatpush1.msra.mxu0 %v95
    %131 = vmatprep.subr.mxu0 0.0
    %132 = vmatpush1.msra.mxu0 %v96
    %133 = vmatprep.subr.mxu0 0.0
    %134 = vmatpush1.msra.mxu0 %v97
    %135 = vmatprep.subr.mxu0 0.0
    %136 = vmatpush1.msra.mxu0 %v98
    %137 = vmatprep.subr.mxu0 0.0
    %138 = vmatpush1.msra.mxu0 %v99
    %139 = vmatprep.subr.mxu0 0.0
    %140 = vmatpush1.msra.mxu0 0.0
    %141 = vmatprep.subr.mxu0 0.0
    %142 = vmatpush1.msra.mxu0 0.0
    %143 = vmatprep.subr.mxu0 0.0
    %144 = vmatpush1.msra.mxu0 0.0
    %145 = vmatprep.subr.mxu0 0.0
    %146 = vmatpush1.msra.mxu0 0.0
    %147 = vmatprep.subr.mxu0 0.0
    %148 = vmatpush1.msra.mxu0 0.0
    %149 = vmatprep.subr.mxu0 0.0
    %150 = vmatpush1.msra.mxu0 0.0
    %151 = vmatprep.subr.mxu0 0.0
    %152 = vmatpush1.msra.mxu0 0.0
    %153 = vmatprep.subr.mxu0 0.0
    %154 = vmatpush1.msra.mxu0 0.0
    %155 = vmatprep.subr.mxu0 0.0
    %156 = vmatpush1.msra.mxu0 0.0
    %157 = vmatprep.subr.mxu0 0.0
    %158 = vmatpush1.msra.mxu0 0.0
    %159 = vmatprep.subr.mxu0 0.0
    %160 = vmatpush1.msra.mxu0 0.0
    %161 = vmatprep.subr.mxu0 0.0
    %162 = vmatpush1.msra.mxu0 0.0
    %163 = vmatprep.subr.mxu0 0.0
    %164 = vmatpush1.msra.mxu0 0.0
    %165 = vmatprep.subr.mxu0 0.0
    %166 = vmatpush1.msra.mxu0 0.0
    %167 = vmatprep.subr.mxu0 0.0
    %168 = vmatpush1.msra.mxu0 0.0
    %169 = vmatprep.subr.mxu0 0.0
    %170 = vmatpush1.msra.mxu0 0.0
    %171 = vmatprep.mubr.f32.mxu0 0.0
    %172 = vmatmul.mubr.f32.gmra.mrb[0].mxu0 %v82
    %v173 = vpop.f32.mrb[0].mxu0
    %v174 = vadd.f32 %v105, %v173
    %v175 = vpop.f32.mrb[0].mxu0
    %176 = vmatprep.mubr.f32.mxu0 0.0
    %177 = vmatmul.mubr.f32.gmra.mrb[0].mxu0 %v83
    %v178 = vpop.f32.mrb[0].mxu0
    %v179 = vadd.f32 %v105, %v178
    %v180 = vpop.f32.mrb[0].mxu0
    %181 = vdwg.mxu0
    %v182 = vmax.f32 %v174, 0.0
    %v183 = vmax.f32 %v179, 0.0
    %184 = vst [vmem:[#allocation2] sm:$0xff] %v182
    %185 = vst [vmem:[#allocation2 + $0x8] sm:$0xff] %v183
    %v186 = vld [vmem:[#allocation2] sm:$0xff]
    %v187 = vld [vmem:[#allocation2 + $0x8] sm:$0xff]
    %v188 = vld [vmem:[#allocation8] sm:$0xff]
    %v189 = vld [vmem:[#allocation8 + $0x8] sm:$0xff]
    %v190 = vld [vmem:[#allocation8 + $0x10] sm:$0xff]
    %v191 = vld [vmem:[#allocation8 + $0x18] sm:$0xff]
    %v192 = vld [vmem:[#allocation8 + $0x20] sm:$0xff]
    %v193 = vld [vmem:[#allocation8 + $0x28] sm:$0xff]
    %v194 = vld [vmem:[#allocation8 + $0x30] sm:$0xff]
    %v195 = vld [vmem:[#allocation8 + $0x38] sm:$0xff]
    %v196 = vld [vmem:[#allocation8 + $0x40] sm:$0xff]
    %v197 = vld [vmem:[#allocation8 + $0x48] sm:$0xff]
    %v198 = vld [vmem:[#allocation8 + $0x50] sm:$0xff]
    %v199 = vld [vmem:[#allocation8 + $0x58] sm:$0xff]
    %v200 = vld [vmem:[#allocation8 + $0x60] sm:$0xff]
    %v201 = vld [vmem:[#allocation8 + $0x68] sm:$0xff]
    %v202 = vld [vmem:[#allocation8 + $0x70] sm:$0xff]
    %v203 = vld [vmem:[#allocation8 + $0x78] sm:$0xff]
    %v204 = vld [vmem:[%s4] sm:$0x1]
    %v206 = vlaneseq
    %v207 = vshrl.u32 %v206, 7
    %v208 = vsub.s32 0, %v207
    %v209 = vrot.slane %v204, %v208
    %211 = vmatprep.subr.mxu0 0.0
    %212 = vmatpush1.msra.mxu0 %v188
    %213 = vmatprep.subr.mxu0 0.0
    %214 = vmatpush1.msra.mxu0 %v189
    %215 = vmatprep.subr.mxu0 0.0
    %216 = vmatpush1.msra.mxu0 %v190
    %217 = vmatprep.subr.mxu0 0.0
    %218 = vmatpush1.msra.mxu0 %v191
    %219 = vmatprep.subr.mxu0 0.0
    %220 = vmatpush1.msra.mxu0 %v192
    %221 = vmatprep.subr.mxu0 0.0
    %222 = vmatpush1.msra.mxu0 %v193
    %223 = vmatprep.subr.mxu0 0.0
    %224 = vmatpush1.msra.mxu0 %v194
    %225 = vmatprep.subr.mxu0 0.0
    %226 = vmatpush1.msra.mxu0 %v195
    %227 = vmatprep.subr.mxu0 0.0
    %228 = vmatpush1.msra.mxu0 %v196
    %229 = vmatprep.subr.mxu0 0.0
    %230 = vmatpush1.msra.mxu0 %v197
    %231 = vmatprep.subr.mxu0 0.0
    %232 = vmatpush1.msra.mxu0 %v198
    %233 = vmatprep.subr.mxu0 0.0
    %234 = vmatpush1.msra.mxu0 %v199
    %235 = vmatprep.subr.mxu0 0.0
    %236 = vmatpush1.msra.mxu0 %v200
    %237 = vmatprep.subr.mxu0 0.0
    %238 = vmatpush1.msra.mxu0 %v201
    %239 = vmatprep.subr.mxu0 0.0
    %240 = vmatpush1.msra.mxu0 %v202
    %241 = vmatprep.subr.mxu0 0.0
    %242 = vmatpush1.msra.mxu0 %v203
    %243 = vmatprep.subr.mxu0 0.0
    %244 = vmatpush1.msra.mxu0 0.0
    %245 = vmatprep.subr.mxu0 0.0
    %246 = vmatpush1.msra.mxu0 0.0
    %247 = vmatprep.subr.mxu0 0.0
    %248 = vmatpush1.msra.mxu0 0.0
    %249 = vmatprep.subr.mxu0 0.0
    %250 = vmatpush1.msra.mxu0 0.0
    %251 = vmatprep.subr.mxu0 0.0
    %252 = vmatpush1.msra.mxu0 0.0
    %253 = vmatprep.subr.mxu0 0.0
    %254 = vmatpush1.msra.mxu0 0.0
    %255 = vmatprep.subr.mxu0 0.0
    %256 = vmatpush1.msra.mxu0 0.0
    %257 = vmatprep.subr.mxu0 0.0
    %258 = vmatpush1.msra.mxu0 0.0
    %259 = vmatprep.subr.mxu0 0.0
    %260 = vmatpush1.msra.mxu0 0.0
    %261 = vmatprep.subr.mxu0 0.0
    %262 = vmatpush1.msra.mxu0 0.0
    %263 = vmatprep.subr.mxu0 0.0
    %264 = vmatpush1.msra.mxu0 0.0
    %265 = vmatprep.subr.mxu0 0.0
    %266 = vmatpush1.msra.mxu0 0.0
    %267 = vmatprep.subr.mxu0 0.0
    %268 = vmatpush1.msra.mxu0 0.0
    %269 = vmatprep.subr.mxu0 0.0
    %270 = vmatpush1.msra.mxu0 0.0
    %271 = vmatprep.subr.mxu0 0.0
    %272 = vmatpush1.msra.mxu0 0.0
    %273 = vmatprep.subr.mxu0 0.0
    %274 = vmatpush1.msra.mxu0 0.0
    %275 = vmatprep.mubr.f32.mxu0 0.0
    %276 = vmatmul.mubr.f32.gmra.mrb[0].mxu0 %v186
    %v277 = vpop.f32.mrb[0].mxu0
    %v278 = vadd.f32 %v209, %v277
    %v279 = vpop.f32.mrb[0].mxu0
    %280 = vmatprep.mubr.f32.mxu0 0.0
    %281 = vmatmul.mubr.f32.gmra.mrb[0].mxu0 %v187
    %v282 = vpop.f32.mrb[0].mxu0
    %v283 = vadd.f32 %v209, %v282
    %v284 = vpop.f32.mrb[0].mxu0
    %285 = vdwg.mxu0
    %v286 = vmax.f32 %v278, 0.0
    %v287 = vmax.f32 %v283, 0.0
    %288 = vst [vmem:[#allocation2] sm:$0xff] %v286
    %289 = vst [vmem:[#allocation2 + $0x8] sm:$0xff] %v287
    %v290 = vld [vmem:[#allocation2] sm:$0xff]
    %v291 = vld [vmem:[#allocation2 + $0x8] sm:$0xff]
    %v292 = vld [vmem:[#allocation9] sm:$0xff]
    %v293 = vld [vmem:[#allocation9 + $0x8] sm:$0xff]
    %v294 = vld [vmem:[#allocation9 + $0x10] sm:$0xff]
    %v295 = vld [vmem:[#allocation9 + $0x18] sm:$0xff]
    %v296 = vld [vmem:[#allocation9 + $0x20] sm:$0xff]
    %v297 = vld [vmem:[#allocation9 + $0x28] sm:$0xff]
    %v298 = vld [vmem:[#allocation9 + $0x30] sm:$0xff]
    %v299 = vld [vmem:[#allocation9 + $0x38] sm:$0xff]
    %v300 = vld [vmem:[#allocation9 + $0x40] sm:$0xff]
    %v301 = vld [vmem:[#allocation9 + $0x48] sm:$0xff]
    %v302 = vld [vmem:[#allocation9 + $0x50] sm:$0xff]
    %v303 = vld [vmem:[#allocation9 + $0x58] sm:$0xff]
    %v304 = vld [vmem:[#allocation9 + $0x60] sm:$0xff]
    %v305 = vld [vmem:[#allocation9 + $0x68] sm:$0xff]
    %v306 = vld [vmem:[#allocation9 + $0x70] sm:$0xff]
    %v307 = vld [vmem:[#allocation9 + $0x78] sm:$0xff]
    %v308 = vld [vmem:[%s6] sm:$0x1]
    %v310 = vlaneseq
    %v311 = vshrl.u32 %v310, 7
    %v312 = vsub.s32 0, %v311
    %v313 = vrot.slane %v308, %v312
    %315 = vmatprep.subr.mxu0 0.0
    %316 = vmatpush1.msra.mxu0 %v292
    %317 = vmatprep.subr.mxu0 0.0
    %318 = vmatpush1.msra.mxu0 %v293
    %319 = vmatprep.subr.mxu0 0.0
    %320 = vmatpush1.msra.mxu0 %v294
    %321 = vmatprep.subr.mxu0 0.0
    %322 = vmatpush1.msra.mxu0 %v295
    %323 = vmatprep.subr.mxu0 0.0
    %324 = vmatpush1.msra.mxu0 %v296
    %325 = vmatprep.subr.mxu0 0.0
    %326 = vmatpush1.msra.mxu0 %v297
    %327 = vmatprep.subr.mxu0 0.0
    %328 = vmatpush1.msra.mxu0 %v298
    %329 = vmatprep.subr.mxu0 0.0
    %330 = vmatpush1.msra.mxu0 %v299
    %331 = vmatprep.subr.mxu0 0.0
    %332 = vmatpush1.msra.mxu0 %v300
    %333 = vmatprep.subr.mxu0 0.0
    %334 = vmatpush1.msra.mxu0 %v301
    %335 = vmatprep.subr.mxu0 0.0
    %336 = vmatpush1.msra.mxu0 %v302
    %337 = vmatprep.subr.mxu0 0.0
    %338 = vmatpush1.msra.mxu0 %v303
    %339 = vmatprep.subr.mxu0 0.0
    %340 = vmatpush1.msra.mxu0 %v304
    %341 = vmatprep.subr.mxu0 0.0
    %342 = vmatpush1.msra.mxu0 %v305
    %343 = vmatprep.subr.mxu0 0.0
    %344 = vmatpush1.msra.mxu0 %v306
    %345 = vmatprep.subr.mxu0 0.0
    %346 = vmatpush1.msra.mxu0 %v307
    %347 = vmatprep.subr.mxu0 0.0
    %348 = vmatpush1.msra.mxu0 0.0
    %349 = vmatprep.subr.mxu0 0.0
    %350 = vmatpush1.msra.mxu0 0.0
    %351 = vmatprep.subr.mxu0 0.0
    %352 = vmatpush1.msra.mxu0 0.0
    %353 = vmatprep.subr.mxu0 0.0
    %354 = vmatpush1.msra.mxu0 0.0
    %355 = vmatprep.subr.mxu0 0.0
    %356 = vmatpush1.msra.mxu0 0.0
    %357 = vmatprep.subr.mxu0 0.0
    %358 = vmatpush1.msra.mxu0 0.0
    %359 = vmatprep.subr.mxu0 0.0
    %360 = vmatpush1.msra.mxu0 0.0
    %361 = vmatprep.subr.mxu0 0.0
    %362 = vmatpush1.msra.mxu0 0.0
    %363 = vmatprep.subr.mxu0 0.0
    %364 = vmatpush1.msra.mxu0 0.0
    %365 = vmatprep.subr.mxu0 0.0
    %366 = vmatpush1.msra.mxu0 0.0
    %367 = vmatprep.subr.mxu0 0.0
    %368 = vmatpush1.msra.mxu0 0.0
    %369 = vmatprep.subr.mxu0 0.0
    %370 = vmatpush1.msra.mxu0 0.0
    %371 = vmatprep.subr.mxu0 0.0
    %372 = vmatpush1.msra.mxu0 0.0
    %373 = vmatprep.subr.mxu0 0.0
    %374 = vmatpush1.msra.mxu0 0.0
    %375 = vmatprep.subr.mxu0 0.0
    %376 = vmatpush1.msra.mxu0 0.0
    %377 = vmatprep.subr.mxu0 0.0
    %378 = vmatpush1.msra.mxu0 0.0
    %379 = vmatprep.mubr.f32.mxu0 0.0
    %380 = vmatmul.mubr.f32.gmra.mrb[0].mxu0 %v290
    %v381 = vpop.f32.mrb[0].mxu0
    %v382 = vadd.f32 %v313, %v381
    %v383 = vpop.f32.mrb[0].mxu0
    %384 = vmatprep.mubr.f32.mxu0 0.0
    %385 = vmatmul.mubr.f32.gmra.mrb[0].mxu0 %v291
    %v386 = vpop.f32.mrb[0].mxu0
    %v387 = vadd.f32 %v313, %v386
    %v388 = vpop.f32.mrb[0].mxu0
    %389 = vdwg.mxu0
    %390 = vst [vmem:[#allocation11] sm:$0xff] %v382
    %391 = vst [vmem:[#allocation11 + $0x8] sm:$0xff] %v387
    // Predicated region
    $region46: #{tpu_custom_call.1} parent=1 // pred_check
      _
    $region47: #{tpu_custom_call.1} parent=1 // pred_check_branch
      %393 = sbr.rel (0) target = $region49
    $region48: #{tpu_custom_call.1} parent=1 // pred_region
      %s395 = ssub.s32 256, 256
      %396 = vsyncadd [#allocation5], %s395
      %s397 = sshll.u32 [#allocation11], 4
      %s398 = int_to_ptr.vmem [resolvable:$true] %s397
      %403 = dma.vmem_to_hbm [thread:$0]  %s398, 256, %s7, [#allocation5], 128, 128, 8
    $region49: #{tpu_custom_call.1} parent=1 // pred_fallthru
      _
    // Predicated region
    $region50: #{tpu_custom_call.1} parent=1 // pred_check
      _
    $region51: #{tpu_custom_call.1} parent=1 // pred_check_branch
      %405 = sbr.rel (0) target = $region53
    $region52: #{tpu_custom_call.1} parent=1 // pred_region
      %406 = dma.done [#allocation5], 256
    $region53: #{tpu_custom_call.1} parent=1 // pred_fallthru
      _
    %407 = vsyncpa [#allocation4], 1
    %408 = vsyncpa [#allocation7], 1
    %409 = vsyncpa [#allocation10], 1
    %410 = vsyncpa [#allocation5], 1

// kernel: tpu_custom_call.1
$region0: #{tpu_custom_call.1}
  #allocation0 [shape = 'u32[]', space=smem, size = 0x4, offset = 0x4, fixed_abs, tag = 'smem constant byte address 0x4 - core index']
  #allocation1 [shape = 'u32[144,128]{1,0:T(1,128)}', space=vmem, size = 0x12000, scoped, tag = 'internal scratch']
  #allocation2 [shape = 'f32[16,128]{1,0:T(8,128)}', space=vmem, size = 0x2000, scoped, tag = 'scratch operand']
  %s0 = inlined_call_operand.hbm [shape: f32[16,128], index: 0, kind: input, shape index: {}]
  %s1 = inlined_call_operand.hbm [shape: f32[128,128], index: 1, kind: input, shape index: {}]
  %s2 = inlined_call_operand.vmem [shape: f32[1,128], index: 2, kind: input, shape index: {}]
  %s3 = inlined_call_operand.hbm [shape: f32[128,128], index: 3, kind: input, shape index: {}]
  %s4 = inlined_call_operand.vmem [shape: f32[1,128], index: 4, kind: input, shape index: {}]
  %s5 = inlined_call_operand.hbm [shape: f32[128,128], index: 5, kind: input, shape index: {}]
  %s6 = inlined_call_operand.vmem [shape: f32[1,128], index: 6, kind: input, shape index: {}]
  %s7 = inlined_call_operand.hbm [shape: f32[16,128], index: 7, kind: output, shape index: {}]
  %s8 = sld [smem:[#allocation0]]
  $region54: #{tpu_custom_call.1} parent=0
    _
  %s10 = ssub.s32 1, %s8
  %s11 = scalar_select 0, %s10, %s8
  $region1: #{tpu_custom_call.1} parent=0
    #allocation3 [shape = 'u8[8192]{0}', space=vmem, size = 0x2000, scoped, tag = 'input window, operand 0, single buffered']
    #allocation4 [shape = 's32[1]{0}', space=sflag, size = 0x4, scoped, tag = 'scoped memory for tpu_custom_call.1']
    #allocation5 [shape = 's32[1]{0}', space=sflag, size = 0x4, scoped, tag = 'scoped memory for tpu_custom_call.1']
    #allocation6 [shape = 'u8[65536]{0}', space=vmem, size = 0x10000, scoped, tag = 'input window, operand 1, single buffered']
    #allocation7 [shape = 's32[1]{0}', space=sflag, size = 0x4, scoped, tag = 'scoped memory for tpu_custom_call.1']
    #allocation8 [shape = 'u8[65536]{0}', space=vmem, size = 0x10000, scoped, tag = 'input window, operand 3, single buffered']
    #allocation9 [shape = 'u8[65536]{0}', space=vmem, size = 0x10000, scoped, tag = 'input window, operand 5, single buffered']
    #allocation10 [shape = 's32[1]{0}', space=sflag, size = 0x4, scoped, tag = 'scoped memory for tpu_custom_call.1']
    #allocation11 [shape = 'u8[8192]{0}', space=vmem, size = 0x2000, scoped, tag = 'output window, operand 0, single buffered']
    %12 = vsyncpa [#allocation4], 0
    %13 = vsyncpa [#allocation7], 0
    %14 = vsyncpa [#allocation10], 0
    %15 = vsyncpa [#allocation5], 0
    // Predicated region
    $region2: #{tpu_custom_call.1} parent=1 // pred_check
      _
    $region3: #{tpu_custom_call.1} parent=1 // pred_check_branch
      %17 = sbr.rel (0) target = $region5
    $region4: #{tpu_custom_call.1} parent=1 // pred_region
      %s19 = ssub.s32 256, 256
      %20 = vsyncadd [#allocation4], %s19
      %s21 = sshll.u32 [#allocation3], 4
      %s22 = int_to_ptr.vmem [resolvable:$true] %s21
      %27 = dma.hbm_to_vmem [thread:$0]  %s0, 256, %s22, [#allocation4], 128, 128, 8
    $region5: #{tpu_custom_call.1} parent=1 // pred_fallthru
      _
    // Predicated region
    $region6: #{tpu_custom_call.1} parent=1 // pred_check
      _
    $region7: #{tpu_custom_call.1} parent=1 // pred_check_branch
      %29 = sbr.rel (0) target = $region9
    $region8: #{tpu_custom_call.1} parent=1 // pred_region
      %s31 = ssub.s32 2048, 2048
      %32 = vsyncadd [#allocation7], %s31
      %s33 = sshll.u32 [#allocation6], 4
      %s34 = int_to_ptr.vmem [resolvable:$true] %s33
      %39 = dma.hbm_to_vmem [thread:$0]  %s1, 2048, %s34, [#allocation7], 128, 128, 8
    $region9: #{tpu_custom_call.1} parent=1 // pred_fallthru
      _
    // Predicated region
    $region10: #{tpu_custom_call.1} parent=1 // pred_check
      _
    $region11: #{tpu_custom_call.1} parent=1 // pred_check_branch
      %41 = sbr.rel (0) target = $region13
    $region12: #{tpu_custom_call.1} parent=1 // pred_region
      _
    $region13: #{tpu_custom_call.1} parent=1 // pred_fallthru
      _
    // Predicated region
    $region14: #{tpu_custom_call.1} parent=1 // pred_check
      _
    $region15: #{tpu_custom_call.1} parent=1 // pred_check_branch
      %43 = sbr.rel (0) target = $region17
    $region16: #{tpu_custom_call.1} parent=1 // pred_region
      %s45 = ssub.s32 2048, 2048
      %46 = vsyncadd [#allocation7], %s45
      %s47 = sshll.u32 [#allocation8], 4
      %s48 = int_to_ptr.vmem [resolvable:$true] %s47
      %53 = dma.hbm_to_vmem [thread:$0]  %s3, 2048, %s48, [#allocation7], 128, 128, 8
    $region17: #{tpu_custom_call.1} parent=1 // pred_fallthru
      _
    // Predicated region
    $region18: #{tpu_custom_call.1} parent=1 // pred_check
      _
    $region19: #{tpu_custom_call.1} parent=1 // pred_check_branch
      %55 = sbr.rel (0) target = $region21
    $region20: #{tpu_custom_call.1} parent=1 // pred_region
      _
    $region21: #{tpu_custom_call.1} parent=1 // pred_fallthru
      _
    // Predicated region
    $region22: #{tpu_custom_call.1} parent=1 // pred_check
      _
    $region23: #{tpu_custom_call.1} parent=1 // pred_check_branch
      %57 = sbr.rel (0) target = $region25
    $region24: #{tpu_custom_call.1} parent=1 // pred_region
      %s59 = ssub.s32 2048, 2048
      %60 = vsyncadd [#allocation10], %s59
      %s61 = sshll.u32 [#allocation9], 4
      %s62 = int_to_ptr.vmem [resolvable:$true] %s61
      %67 = dma.hbm_to_vmem [thread:$0]  %s5, 2048, %s62, [#allocation10], 128, 128, 8
    $region25: #{tpu_custom_call.1} parent=1 // pred_fallthru
      _
    // Predicated region
    $region26: #{tpu_custom_call.1} parent=1 // pred_check
      _
    $region27: #{tpu_custom_call.1} parent=1 // pred_check_branch
      %69 = sbr.rel (0) target = $region29
    $region28: #{tpu_custom_call.1} parent=1 // pred_region
      _
    $region29: #{tpu_custom_call.1} parent=1 // pred_fallthru
      _
    // Predicated region
    $region30: #{tpu_custom_call.1} parent=1 // pred_check
      _
    $region31: #{tpu_custom_call.1} parent=1 // pred_check_branch
      %71 = sbr.rel (0) target = $region33
    $region32: #{tpu_custom_call.1} parent=1 // pred_region
      %72 = dma.done [#allocation4], 256
    $region33: #{tpu_custom_call.1} parent=1 // pred_fallthru
      _
    // Predicated region
    $region34: #{tpu_custom_call.1} parent=1 // pred_check
      _
    $region35: #{tpu_custom_call.1} parent=1 // pred_check_branch
      %74 = sbr.rel (0) target = $region37
    $region36: #{tpu_custom_call.1} parent=1 // pred_region
      %75 = dma.done [#allocation7], 2048
    $region37: #{tpu_custom_call.1} parent=1 // pred_fallthru
      _
    // Predicated region
    $region38: #{tpu_custom_call.1} parent=1 // pred_check
      _
    $region39: #{tpu_custom_call.1} parent=1 // pred_check_branch
      %77 = sbr.rel (0) target = $region41
    $region40: #{tpu_custom_call.1} parent=1 // pred_region
      %78 = dma.done [#allocation7], 2048
    $region41: #{tpu_custom_call.1} parent=1 // pred_fallthru
      _
    // Predicated region
    $region42: #{tpu_custom_call.1} parent=1 // pred_check
      _
    $region43: #{tpu_custom_call.1} parent=1 // pred_check_branch
      %80 = sbr.rel (0) target = $region45
    $region44: #{tpu_custom_call.1} parent=1 // pred_region
      %81 = dma.done [#allocation10], 2048
    $region45: #{tpu_custom_call.1} parent=1 // pred_fallthru
      _
    %v82 = vld [vmem:[#allocation3] sm:$0xff]
    %v83 = vld [vmem:[#allocation3 + $0x8] sm:$0xff]
    %v84 = vld [vmem:[#allocation6] sm:$0xff]
    %v85 = vld [vmem:[#allocation6 + $0x8] sm:$0xff]
    %v86 = vld [vmem:[#allocation6 + $0x10] sm:$0xff]
    %v87 = vld [vmem:[#allocation6 + $0x18] sm:$0xff]
    %v88 = vld [vmem:[#allocation6 + $0x20] sm:$0xff]
    %v89 = vld [vmem:[#allocation6 + $0x28] sm:$0xff]
    %v90 = vld [vmem:[#allocation6 + $0x30] sm:$0xff]
    %v91 = vld [vmem:[#allocation6 + $0x38] sm:$0xff]
    %v92 = vld [vmem:[#allocation6 + $0x40] sm:$0xff]
    %v93 = vld [vmem:[#allocation6 + $0x48] sm:$0xff]
    %v94 = vld [vmem:[#allocation6 + $0x50] sm:$0xff]
    %v95 = vld [vmem:[#allocation6 + $0x58] sm:$0xff]
    %v96 = vld [vmem:[#allocation6 + $0x60] sm:$0xff]
    %v97 = vld [vmem:[#allocation6 + $0x68] sm:$0xff]
    %v98 = vld [vmem:[#allocation6 + $0x70] sm:$0xff]
    %v99 = vld [vmem:[#allocation6 + $0x78] sm:$0xff]
    %v100 = vld [vmem:[%s2] sm:$0x1]
    %v102 = vlaneseq
    %v103 = vshrl.u32 %v102, 7
    %v104 = vsub.s32 0, %v103
    %v105 = vrot.slane %v100, %v104
    %107 = vmatprep.subr.mxu0 0.0
    %108 = vmatpush1.msra.mxu0 %v84
    %109 = vmatprep.subr.mxu0 0.0
    %110 = vmatpush1.msra.mxu0 %v85
    %111 = vmatprep.subr.mxu0 0.0
    %112 = vmatpush1.msra.mxu0 %v86
    %113 = vmatprep.subr.mxu0 0.0
    %114 = vmatpush1.msra.mxu0 %v87
    %115 = vmatprep.subr.mxu0 0.0
    %116 = vmatpush1.msra.mxu0 %v88
    %117 = vmatprep.subr.mxu0 0.0
    %118 = vmatpush1.msra.mxu0 %v89
    %119 = vmatprep.subr.mxu0 0.0
    %120 = vmatpush1.msra.mxu0 %v90
    %121 = vmatprep.subr.mxu0 0.0
    %122 = vmatpush1.msra.mxu0 %v91
    %123 = vmatprep.subr.mxu0 0.0
    %124 = vmatpush1.msra.mxu0 %v92
    %125 = vmatprep.subr.mxu0 0.0
    %126 = vmatpush1.msra.mxu0 %v93
    %127 = vmatprep.subr.mxu0 0.0
    %128 = vmatpush1.msra.mxu0 %v94
    %129 = vmatprep.subr.mxu0 0.0
    %130 = vmatpush1.msra.mxu0 %v95
    %131 = vmatprep.subr.mxu0 0.0
    %132 = vmatpush1.msra.mxu0 %v96
    %133 = vmatprep.subr.mxu0 0.0
    %134 = vmatpush1.msra.mxu0 %v97
    %135 = vmatprep.subr.mxu0 0.0
    %136 = vmatpush1.msra.mxu0 %v98
    %137 = vmatprep.subr.mxu0 0.0
    %138 = vmatpush1.msra.mxu0 %v99
    %139 = vmatprep.subr.mxu0 0.0
    %140 = vmatpush1.msra.mxu0 0.0
    %141 = vmatprep.subr.mxu0 0.0
    %142 = vmatpush1.msra.mxu0 0.0
    %143 = vmatprep.subr.mxu0 0.0
    %144 = vmatpush1.msra.mxu0 0.0
    %145 = vmatprep.subr.mxu0 0.0
    %146 = vmatpush1.msra.mxu0 0.0
    %147 = vmatprep.subr.mxu0 0.0
    %148 = vmatpush1.msra.mxu0 0.0
    %149 = vmatprep.subr.mxu0 0.0
    %150 = vmatpush1.msra.mxu0 0.0
    %151 = vmatprep.subr.mxu0 0.0
    %152 = vmatpush1.msra.mxu0 0.0
    %153 = vmatprep.subr.mxu0 0.0
    %154 = vmatpush1.msra.mxu0 0.0
    %155 = vmatprep.subr.mxu0 0.0
    %156 = vmatpush1.msra.mxu0 0.0
    %157 = vmatprep.subr.mxu0 0.0
    %158 = vmatpush1.msra.mxu0 0.0
    %159 = vmatprep.subr.mxu0 0.0
    %160 = vmatpush1.msra.mxu0 0.0
    %161 = vmatprep.subr.mxu0 0.0
    %162 = vmatpush1.msra.mxu0 0.0
    %163 = vmatprep.subr.mxu0 0.0
    %164 = vmatpush1.msra.mxu0 0.0
    %165 = vmatprep.subr.mxu0 0.0
    %166 = vmatpush1.msra.mxu0 0.0
    %167 = vmatprep.subr.mxu0 0.0
    %168 = vmatpush1.msra.mxu0 0.0
    %169 = vmatprep.subr.mxu0 0.0
    %170 = vmatpush1.msra.mxu0 0.0
    %171 = vmatprep.mubr.f32.mxu0 0.0
    %172 = vmatmul.mubr.f32.gmra.mrb[0].mxu0 %v82
    %v173 = vpop.f32.mrb[0].mxu0
    %v174 = vadd.f32 %v105, %v173
    %v175 = vpop.f32.mrb[0].mxu0
    %176 = vmatprep.mubr.f32.mxu0 0.0
    %177 = vmatmul.mubr.f32.gmra.mrb[0].mxu0 %v83
    %v178 = vpop.f32.mrb[0].mxu0
    %v179 = vadd.f32 %v105, %v178
    %v180 = vpop.f32.mrb[0].mxu0
    %181 = vdwg.mxu0
    %v182 = vmax.f32 %v174, 0.0
    %v183 = vmax.f32 %v179, 0.0
    %184 = vst [vmem:[#allocation2] sm:$0xff] %v182
    %185 = vst [vmem:[#allocation2 + $0x8] sm:$0xff] %v183
    %v186 = vld [vmem:[#allocation2] sm:$0xff]
    %v187 = vld [vmem:[#allocation2 + $0x8] sm:$0xff]
    %v188 = vld [vmem:[#allocation8] sm:$0xff]
    %v189 = vld [vmem:[#allocation8 + $0x8] sm:$0xff]
    %v190 = vld [vmem:[#allocation8 + $0x10] sm:$0xff]
    %v191 = vld [vmem:[#allocation8 + $0x18] sm:$0xff]
    %v192 = vld [vmem:[#allocation8 + $0x20] sm:$0xff]
    %v193 = vld [vmem:[#allocation8 + $0x28] sm:$0xff]
    %v194 = vld [vmem:[#allocation8 + $0x30] sm:$0xff]
    %v195 = vld [vmem:[#allocation8 + $0x38] sm:$0xff]
    %v196 = vld [vmem:[#allocation8 + $0x40] sm:$0xff]
    %v197 = vld [vmem:[#allocation8 + $0x48] sm:$0xff]
    %v198 = vld [vmem:[#allocation8 + $0x50] sm:$0xff]
    %v199 = vld [vmem:[#allocation8 + $0x58] sm:$0xff]
    %v200 = vld [vmem:[#allocation8 + $0x60] sm:$0xff]
    %v201 = vld [vmem:[#allocation8 + $0x68] sm:$0xff]
    %v202 = vld [vmem:[#allocation8 + $0x70] sm:$0xff]
    %v203 = vld [vmem:[#allocation8 + $0x78] sm:$0xff]
    %v204 = vld [vmem:[%s4] sm:$0x1]
    %v206 = vlaneseq
    %v207 = vshrl.u32 %v206, 7
    %v208 = vsub.s32 0, %v207
    %v209 = vrot.slane %v204, %v208
    %211 = vmatprep.subr.mxu0 0.0
    %212 = vmatpush1.msra.mxu0 %v188
    %213 = vmatprep.subr.mxu0 0.0
    %214 = vmatpush1.msra.mxu0 %v189
    %215 = vmatprep.subr.mxu0 0.0
    %216 = vmatpush1.msra.mxu0 %v190
    %217 = vmatprep.subr.mxu0 0.0
    %218 = vmatpush1.msra.mxu0 %v191
    %219 = vmatprep.subr.mxu0 0.0
    %220 = vmatpush1.msra.mxu0 %v192
    %221 = vmatprep.subr.mxu0 0.0
    %222 = vmatpush1.msra.mxu0 %v193
    %223 = vmatprep.subr.mxu0 0.0
    %224 = vmatpush1.msra.mxu0 %v194
    %225 = vmatprep.subr.mxu0 0.0
    %226 = vmatpush1.msra.mxu0 %v195
    %227 = vmatprep.subr.mxu0 0.0
    %228 = vmatpush1.msra.mxu0 %v196
    %229 = vmatprep.subr.mxu0 0.0
    %230 = vmatpush1.msra.mxu0 %v197
    %231 = vmatprep.subr.mxu0 0.0
    %232 = vmatpush1.msra.mxu0 %v198
    %233 = vmatprep.subr.mxu0 0.0
    %234 = vmatpush1.msra.mxu0 %v199
    %235 = vmatprep.subr.mxu0 0.0
    %236 = vmatpush1.msra.mxu0 %v200
    %237 = vmatprep.subr.mxu0 0.0
    %238 = vmatpush1.msra.mxu0 %v201
    %239 = vmatprep.subr.mxu0 0.0
    %240 = vmatpush1.msra.mxu0 %v202
    %241 = vmatprep.subr.mxu0 0.0
    %242 = vmatpush1.msra.mxu0 %v203
    %243 = vmatprep.subr.mxu0 0.0
    %244 = vmatpush1.msra.mxu0 0.0
    %245 = vmatprep.subr.mxu0 0.0
    %246 = vmatpush1.msra.mxu0 0.0
    %247 = vmatprep.subr.mxu0 0.0
    %248 = vmatpush1.msra.mxu0 0.0
    %249 = vmatprep.subr.mxu0 0.0
    %250 = vmatpush1.msra.mxu0 0.0
    %251 = vmatprep.subr.mxu0 0.0
    %252 = vmatpush1.msra.mxu0 0.0
    %253 = vmatprep.subr.mxu0 0.0
    %254 = vmatpush1.msra.mxu0 0.0
    %255 = vmatprep.subr.mxu0 0.0
    %256 = vmatpush1.msra.mxu0 0.0
    %257 = vmatprep.subr.mxu0 0.0
    %258 = vmatpush1.msra.mxu0 0.0
    %259 = vmatprep.subr.mxu0 0.0
    %260 = vmatpush1.msra.mxu0 0.0
    %261 = vmatprep.subr.mxu0 0.0
    %262 = vmatpush1.msra.mxu0 0.0
    %263 = vmatprep.subr.mxu0 0.0
    %264 = vmatpush1.msra.mxu0 0.0
    %265 = vmatprep.subr.mxu0 0.0
    %266 = vmatpush1.msra.mxu0 0.0
    %267 = vmatprep.subr.mxu0 0.0
    %268 = vmatpush1.msra.mxu0 0.0
    %269 = vmatprep.subr.mxu0 0.0
    %270 = vmatpush1.msra.mxu0 0.0
    %271 = vmatprep.subr.mxu0 0.0
    %272 = vmatpush1.msra.mxu0 0.0
    %273 = vmatprep.subr.mxu0 0.0
    %274 = vmatpush1.msra.mxu0 0.0
    %275 = vmatprep.mubr.f32.mxu0 0.0
    %276 = vmatmul.mubr.f32.gmra.mrb[0].mxu0 %v186
    %v277 = vpop.f32.mrb[0].mxu0
    %v278 = vadd.f32 %v209, %v277
    %v279 = vpop.f32.mrb[0].mxu0
    %280 = vmatprep.mubr.f32.mxu0 0.0
    %281 = vmatmul.mubr.f32.gmra.mrb[0].mxu0 %v187
    %v282 = vpop.f32.mrb[0].mxu0
    %v283 = vadd.f32 %v209, %v282
    %v284 = vpop.f32.mrb[0].mxu0
    %285 = vdwg.mxu0
    %v286 = vmax.f32 %v278, 0.0
    %v287 = vmax.f32 %v283, 0.0
    %288 = vst [vmem:[#allocation2] sm:$0xff] %v286
    %289 = vst [vmem:[#allocation2 + $0x8] sm:$0xff] %v287
    %v290 = vld [vmem:[#allocation2] sm:$0xff]
    %v291 = vld [vmem:[#allocation2 + $0x8] sm:$0xff]
    %v292 = vld [vmem:[#allocation9] sm:$0xff]
    %v293 = vld [vmem:[#allocation9 + $0x8] sm:$0xff]
    %v294 = vld [vmem:[#allocation9 + $0x10] sm:$0xff]
    %v295 = vld [vmem:[#allocation9 + $0x18] sm:$0xff]
    %v296 = vld [vmem:[#allocation9 + $0x20] sm:$0xff]
    %v297 = vld [vmem:[#allocation9 + $0x28] sm:$0xff]
    %v298 = vld [vmem:[#allocation9 + $0x30] sm:$0xff]
    %v299 = vld [vmem:[#allocation9 + $0x38] sm:$0xff]
    %v300 = vld [vmem:[#allocation9 + $0x40] sm:$0xff]
    %v301 = vld [vmem:[#allocation9 + $0x48] sm:$0xff]
    %v302 = vld [vmem:[#allocation9 + $0x50] sm:$0xff]
    %v303 = vld [vmem:[#allocation9 + $0x58] sm:$0xff]
    %v304 = vld [vmem:[#allocation9 + $0x60] sm:$0xff]
    %v305 = vld [vmem:[#allocation9 + $0x68] sm:$0xff]
    %v306 = vld [vmem:[#allocation9 + $0x70] sm:$0xff]
    %v307 = vld [vmem:[#allocation9 + $0x78] sm:$0xff]
    %v308 = vld [vmem:[%s6] sm:$0x1]
    %v310 = vlaneseq
    %v311 = vshrl.u32 %v310, 7
    %v312 = vsub.s32 0, %v311
    %v313 = vrot.slane %v308, %v312
    %315 = vmatprep.subr.mxu0 0.0
    %316 = vmatpush1.msra.mxu0 %v292
    %317 = vmatprep.subr.mxu0 0.0
    %318 = vmatpush1.msra.mxu0 %v293
    %319 = vmatprep.subr.mxu0 0.0
    %320 = vmatpush1.msra.mxu0 %v294
    %321 = vmatprep.subr.mxu0 0.0
    %322 = vmatpush1.msra.mxu0 %v295
    %323 = vmatprep.subr.mxu0 0.0
    %324 = vmatpush1.msra.mxu0 %v296
    %325 = vmatprep.subr.mxu0 0.0
    %326 = vmatpush1.msra.mxu0 %v297
    %327 = vmatprep.subr.mxu0 0.0
    %328 = vmatpush1.msra.mxu0 %v298
    %329 = vmatprep.subr.mxu0 0.0
    %330 = vmatpush1.msra.mxu0 %v299
    %331 = vmatprep.subr.mxu0 0.0
    %332 = vmatpush1.msra.mxu0 %v300
    %333 = vmatprep.subr.mxu0 0.0
    %334 = vmatpush1.msra.mxu0 %v301
    %335 = vmatprep.subr.mxu0 0.0
    %336 = vmatpush1.msra.mxu0 %v302
    %337 = vmatprep.subr.mxu0 0.0
    %338 = vmatpush1.msra.mxu0 %v303
    %339 = vmatprep.subr.mxu0 0.0
    %340 = vmatpush1.msra.mxu0 %v304
    %341 = vmatprep.subr.mxu0 0.0
    %342 = vmatpush1.msra.mxu0 %v305
    %343 = vmatprep.subr.mxu0 0.0
    %344 = vmatpush1.msra.mxu0 %v306
    %345 = vmatprep.subr.mxu0 0.0
    %346 = vmatpush1.msra.mxu0 %v307
    %347 = vmatprep.subr.mxu0 0.0
    %348 = vmatpush1.msra.mxu0 0.0
    %349 = vmatprep.subr.mxu0 0.0
    %350 = vmatpush1.msra.mxu0 0.0
    %351 = vmatprep.subr.mxu0 0.0
    %352 = vmatpush1.msra.mxu0 0.0
    %353 = vmatprep.subr.mxu0 0.0
    %354 = vmatpush1.msra.mxu0 0.0
    %355 = vmatprep.subr.mxu0 0.0
    %356 = vmatpush1.msra.mxu0 0.0
    %357 = vmatprep.subr.mxu0 0.0
    %358 = vmatpush1.msra.mxu0 0.0
    %359 = vmatprep.subr.mxu0 0.0
    %360 = vmatpush1.msra.mxu0 0.0
    %361 = vmatprep.subr.mxu0 0.0
    %362 = vmatpush1.msra.mxu0 0.0
    %363 = vmatprep.subr.mxu0 0.0
    %364 = vmatpush1.msra.mxu0 0.0
    %365 = vmatprep.subr.mxu0 0.0
    %366 = vmatpush1.msra.mxu0 0.0
    %367 = vmatprep.subr.mxu0 0.0
    %368 = vmatpush1.msra.mxu0 0.0
    %369 = vmatprep.subr.mxu0 0.0
    %370 = vmatpush1.msra.mxu0 0.0
    %371 = vmatprep.subr.mxu0 0.0
    %372 = vmatpush1.msra.mxu0 0.0
    %373 = vmatprep.subr.mxu0 0.0
    %374 = vmatpush1.msra.mxu0 0.0
    %375 = vmatprep.subr.mxu0 0.0
    %376 = vmatpush1.msra.mxu0 0.0
    %377 = vmatprep.subr.mxu0 0.0
    %378 = vmatpush1.msra.mxu0 0.0
    %379 = vmatprep.mubr.f32.mxu0 0.0
    %380 = vmatmul.mubr.f32.gmra.mrb[0].mxu0 %v290
    %v381 = vpop.f32.mrb[0].mxu0
    %v382 = vadd.f32 %v313, %v381
    %v383 = vpop.f32.mrb[0].mxu0
    %384 = vmatprep.mubr.f32.mxu0 0.0
    %385 = vmatmul.mubr.f32.gmra.mrb[0].mxu0 %v291
    %v386 = vpop.f32.mrb[0].mxu0
    %v387 = vadd.f32 %v313, %v386
    %v388 = vpop.f32.mrb[0].mxu0
    %389 = vdwg.mxu0
    %390 = vst [vmem:[#allocation11] sm:$0xff] %v382
    %391 = vst [vmem:[#allocation11 + $0x8] sm:$0xff] %v387
    // Predicated region
    $region46: #{tpu_custom_call.1} parent=1 // pred_check
      _
    $region47: #{tpu_custom_call.1} parent=1 // pred_check_branch
      %393 = sbr.rel (0) target = $region49
    $region48: #{tpu_custom_call.1} parent=1 // pred_region
      %s395 = ssub.s32 256, 256
      %396 = vsyncadd [#allocation5], %s395
      %s397 = sshll.u32 [#allocation11], 4
      %s398 = int_to_ptr.vmem [resolvable:$true] %s397
      %403 = dma.vmem_to_hbm [thread:$0]  %s398, 256, %s7, [#allocation5], 128, 128, 8
    $region49: #{tpu_custom_call.1} parent=1 // pred_fallthru
      _
    // Predicated region
    $region50: #{tpu_custom_call.1} parent=1 // pred_check
      _
    $region51: #{tpu_custom_call.1} parent=1 // pred_check_branch
      %405 = sbr.rel (0) target = $region53
    $region52: #{tpu_custom_call.1} parent=1 // pred_region
      %406 = dma.done [#allocation5], 256
    $region53: #{tpu_custom_call.1} parent=1 // pred_fallthru
      _
    %407 = vsyncpa [#allocation4], 1
    %408 = vsyncpa [#allocation7], 1
    %409 = vsyncpa [#allocation10], 1
    %410 = vsyncpa [#allocation5], 1

</llo_original>
